<compile_context>
chip_gen: v7x
topology: tpu7x:2x2x1
jax: 0.10.0
libtpu: 0.0.40
codegen_flags: <defaults>
</compile_context>

<pallas_src>
import functools
import math

import jax
import jax.numpy as jnp
import numpy as np
from jax.experimental import pallas as pl
from jax.experimental.pallas import tpu as pltpu

_NEG20_OVER_LN10 = -20.0 / math.log(10.0)   # -20 * log10(r) == this * ln(r)
_TINY = 1e-30                               # guards exact-zero / padded rows only


def _sisnr_exact_kernel(pred_ref, gt_ref, out_ref):
    """Whole-row tile: explicit centering + explicit e_noise (reference numerics)."""
    x = pred_ref[...].astype(jnp.float32)
    y = gt_ref[...].astype(jnp.float32)
    x = x - jnp.mean(x, axis=-1, keepdims=True)
    y = y - jnp.mean(y, axis=-1, keepdims=True)

    dot = jnp.sum(y * x, axis=-1, keepdims=True)
    gt_energy = jnp.sum(y * y, axis=-1, keepdims=True)
    scale = dot / jnp.maximum(gt_energy, jnp.float32(_TINY))
    scaled_gt = scale * y
    e_noise = x - scaled_gt
    signal_power = jnp.sum(scaled_gt * scaled_gt, axis=-1, keepdims=True)
    noise_power = jnp.sum(e_noise * e_noise, axis=-1, keepdims=True)

    out_ref[...] = _NEG20_OVER_LN10 * (
        jnp.log(jnp.maximum(signal_power, jnp.float32(_TINY)))
        - jnp.log(jnp.maximum(noise_power, jnp.float32(_TINY))))


def _sisnr_stream_kernel(pred_ref, gt_ref, out_ref, sx, sy, sxy, sxx, syy, *, inv_t):
    """T-chunked path: accumulate raw moments, finalize algebraically at last chunk."""
    t = pl.program_id(1)

    @pl.when(t == 0)
    def _():
        for s in (sx, sy, sxy, sxx, syy):
            s[...] = jnp.zeros_like(s)

    x = pred_ref[...].astype(jnp.float32)
    y = gt_ref[...].astype(jnp.float32)
    sx[...] += jnp.sum(x, axis=-1, keepdims=True)
    sy[...] += jnp.sum(y, axis=-1, keepdims=True)
    sxy[...] += jnp.sum(x * y, axis=-1, keepdims=True)
    sxx[...] += jnp.sum(x * x, axis=-1, keepdims=True)
    syy[...] += jnp.sum(y * y, axis=-1, keepdims=True)

    @pl.when(t == pl.num_programs(1) - 1)
    def _():
        it = jnp.float32(inv_t)                       # 1 / (un-padded) T
        dot = sxy[...] - sx[...] * sy[...] * it       # Σ x_c y_c
        gt_energy = jnp.maximum(syy[...] - sy[...] * sy[...] * it, jnp.float32(_TINY))
        pred_energy = sxx[...] - sx[...] * sx[...] * it
        signal_power = jnp.maximum(dot * dot / gt_energy, jnp.float32(_TINY))
        # TODO(synk): pred_energy - signal_power cancels in f32 for very high-SNR
        # predictions; an exact e_noise would need a second pass over the data.
        noise_power = jnp.maximum(pred_energy - signal_power, jnp.float32(_TINY))
        out_ref[...] = _NEG20_OVER_LN10 * (jnp.log(signal_power) - jnp.log(noise_power))


def _round_up(x, m):
    return ((x + m - 1) // m) * m


def sisnr_loss(pred, gt, *, max_tile_bytes=1 << 20):
    """Pallas TPU implementation of SiSNRLoss.forward.

    pred/gt: (..., T) arrays (any leading dims). Returns the scalar batch-mean
    SI-SNR loss. `max_tile_bytes` is a per-input f32-equivalent VMEM tile budget.
    """
    assert pred.shape == gt.shape, "pred and gt must have identical shapes"
    time = pred.shape[-1]

    # Keep sub-f32 floats native (halves HBM traffic); upcast inside the kernel.
    dt = jnp.promote_types(pred.dtype, gt.dtype)
    if jnp.dtype(dt) not in (jnp.dtype(jnp.float32), jnp.dtype(jnp.bfloat16),
                             jnp.dtype(jnp.float16)):
        dt = jnp.dtype(jnp.float32)
    pred2 = pred.reshape(-1, time).astype(dt)
    gt2 = gt.reshape(-1, time).astype(dt)
    batch = pred2.shape[0]
    itemsize = jnp.dtype(dt).itemsize

    # ----------------------- tiling plan (budgets in f32 bytes) -----------------
    sub = 8 * (4 // itemsize)                  # sublane granularity for the dtype
    min_tile_b = batch if batch < sub else sub

    use_streaming = min_tile_b * time * 4 > max_tile_bytes
    if use_streaming:
        t_chunk = max(512, (max_tile_bytes // (min_tile_b * 4)) // 128 * 128)
        if t_chunk >= time:                    # one chunk covers a row after all
            use_streaming = False

    if use_streaming:
        tile_b = min_tile_b
        batch_pad = _round_up(batch, tile_b)
        time_pad = _round_up(time, t_chunk)    # zero-padded samples are inert
    else:
        t_chunk = time
        time_pad = time
        if batch < 2 * sub:
            tile_b = batch                     # single full-dim batch tile
            batch_pad = batch
        else:
            bp = _round_up(batch, sub)
            rows_budget = max(sub, (max_tile_bytes // max(time * 4, 1)) // sub * sub)
            rows_split = max(sub, (bp // 2) // sub * sub)   # force >= 2 batch tiles
            tile_b = min(rows_budget, rows_split)
            batch_pad = _round_up(batch, tile_b)

    num_b = batch_pad // tile_b
    num_t = time_pad // t_chunk

    if batch_pad != batch or time_pad != time:
        padding = ((0, batch_pad - batch), (0, time_pad - time))
        pred2 = jnp.pad(pred2, padding)
        gt2 = jnp.pad(gt2, padding)

    # Scoped-VMEM: only ever *raise* above a generation default, never lower.
    in_tile_bytes = tile_b * t_chunk * itemsize
    f32_tile_bytes = tile_b * t_chunk * 4
    est_vmem = 2 * 2 * in_tile_bytes + 6 * f32_tile_bytes + (1 << 20)
    vmem_limit = None if est_vmem <= (16 << 20) else min(max(est_vmem, 32 << 20), 48 << 20)

    out_shape = jax.ShapeDtypeStruct((batch_pad, 1), jnp.float32)

    if not use_streaming:
        row_terms = pl.pallas_call(
            _sisnr_exact_kernel,
            out_shape=out_shape,
            grid_spec=pltpu.PrefetchScalarGridSpec(
                num_scalar_prefetch=0,
                grid=(num_b,),
                in_specs=[pl.BlockSpec((tile_b, time), lambda i: (i, 0))] * 2,
                out_specs=pl.BlockSpec((tile_b, 1), lambda i: (i, 0)),
            ),
            compiler_params=pltpu.CompilerParams(
                dimension_semantics=("parallel",),
                vmem_limit_bytes=vmem_limit,
            ),
        )(pred2, gt2)
    else:
        kern = functools.partial(_sisnr_stream_kernel, inv_t=1.0 / time)
        row_terms = pl.pallas_call(
            kern,
            out_shape=out_shape,
            grid_spec=pltpu.PrefetchScalarGridSpec(
                num_scalar_prefetch=0,
                grid=(num_b, num_t),
                in_specs=[pl.BlockSpec((tile_b, t_chunk), lambda b, t: (b, t))] * 2,
                out_specs=pl.BlockSpec((tile_b, 1), lambda b, t: (b, 0)),
                scratch_shapes=[pltpu.VMEM((tile_b, 1), jnp.float32)] * 5,
            ),
            compiler_params=pltpu.CompilerParams(
                dimension_semantics=("parallel", "arbitrary"),
                vmem_limit_bytes=vmem_limit,
            ),
        )(pred2, gt2)

    # Batch mean on the tiny per-row terms; drop any zero-padded rows first.
    return jnp.mean(row_terms[:batch, 0])


# ----------------------------- reference (plain JAX) -----------------------------
def _ref_loss(pred, gt):
    pred = pred - jnp.mean(pred, axis=-1, keepdims=True)
    gt = gt - jnp.mean(gt, axis=-1, keepdims=True)
    dot = jnp.sum(gt * pred, axis=-1, keepdims=True)
    gt_energy = jnp.sum(gt * gt, axis=-1, keepdims=True)
    scaled_gt = (dot / gt_energy) * gt
    e_noise = pred - scaled_gt
    sp = jnp.sum(scaled_gt ** 2, axis=-1, keepdims=True)
    npow = jnp.sum(e_noise ** 2, axis=-1, keepdims=True)
    return jnp.mean(-20.0 * jnp.log10(sp / npow))


if __name__ == "__main__":
    key = jax.random.PRNGKey(0)
    ks = jax.random.split(key, 8)

    # 1) Tiny batch, odd T: single-tile exact path.
    gt1 = jax.random.normal(ks[0], (2, 800), dtype=jnp.float32)
    pred1 = gt1 + 0.3 * jax.random.normal(ks[1], (2, 800), dtype=jnp.float32)
    out1 = jax.block_until_ready(sisnr_loss(pred1, gt1))
    np.testing.assert_allclose(np.asarray(out1), np.asarray(_ref_loss(pred1, gt1)),
                               rtol=2e-3, atol=2e-3)

    # 2) batch=20 (not a multiple of 8): zero-padded to 24, three "parallel" tiles.
    gt2 = jax.random.normal(ks[2], (20, 512), dtype=jnp.float32)
    pred2 = gt2 + 0.5 * jax.random.normal(ks[3], (20, 512), dtype=jnp.float32)
    out2 = jax.block_until_ready(sisnr_loss(pred2, gt2))
    np.testing.assert_allclose(np.asarray(out2), np.asarray(_ref_loss(pred2, gt2)),
                               rtol=2e-3, atol=2e-3)

    # 3) bf16 inputs streamed natively (in-kernel upcast), 2 parallel batch tiles.
    gt3f = jax.random.normal(ks[4], (32, 1024), dtype=jnp.float32)
    pred3f = gt3f + 0.4 * jax.random.normal(ks[5], (32, 1024), dtype=jnp.float32)
    gt3 = gt3f.astype(jnp.bfloat16)
    pred3 = pred3f.astype(jnp.bfloat16)
    out3 = jax.block_until_ready(sisnr_loss(pred3, gt3))
    ref3 = _ref_loss(pred3.astype(jnp.float32), gt3.astype(jnp.float32))
    np.testing.assert_allclose(np.asarray(out3), np.asarray(ref3), rtol=5e-3, atol=5e-3)

    # 4) Forced small budget: streaming path, 4 batch tiles x 3 time chunks.
    gt4 = jax.random.normal(ks[6], (32, 1536), dtype=jnp.float32)
    pred4 = gt4 + 0.5 * jax.random.normal(ks[7], (32, 1536), dtype=jnp.float32)
    out4 = jax.block_until_ready(sisnr_loss(pred4, gt4, max_tile_bytes=8 * 512 * 4))
    np.testing.assert_allclose(np.asarray(out4), np.asarray(_ref_loss(pred4, gt4)),
                               rtol=2e-3, atol=2e-3)

    print("KERNEL_OK")
</pallas_src>

<mosaic_0001>
module attributes {stable_mosaic.version = 11 : i64} {
  func.func @_sisnr_exact_kernel(%arg0: i32, %arg1: memref<2x800xf32, #tpu.memory_space<vmem>>, %arg2: memref<2x800xf32, #tpu.memory_space<vmem>>, %arg3: memref<2x1xf32, #tpu.memory_space<vmem>>) attributes {dimension_semantics = [#tpu.dimension_semantics<parallel>], iteration_bounds = array<i64: 1>, scalar_prefetch = 0 : i64, scratch_operands = 0 : i64, tpu.core_type = #tpu.core_type<tc>, window_params = [{transform_indices = @transform_0, window_bounds = array<i64: 2, 800>}, {transform_indices = @transform_1, window_bounds = array<i64: 2, 800>}, {transform_indices = @transform_2, window_bounds = array<i64: 2, 1>}]} {
    %c0 = arith.constant 0 : index
    %c0_0 = arith.constant 0 : index
    %0 = vector.load %arg1[%c0, %c0_0] : memref<2x800xf32, #tpu.memory_space<vmem>>, vector<2x800xf32>
    %c0_1 = arith.constant 0 : index
    %c0_2 = arith.constant 0 : index
    %1 = vector.load %arg2[%c0_1, %c0_2] : memref<2x800xf32, #tpu.memory_space<vmem>>, vector<2x800xf32>
    %cst = arith.constant dense<0.000000e+00> : vector<2xf32>
    %2 = vector.multi_reduction <add>, %0, %cst [1] : vector<2x800xf32> to vector<2xf32>
    %3 = vector.shape_cast %2 : vector<2xf32> to vector<2x1xf32>
    %cst_3 = arith.constant 8.000000e+02 : f32
    %4 = vector.broadcast %cst_3 : f32 to vector<2x1xf32>
    %5 = arith.divf %3, %4 : vector<2x1xf32>
    %6 = vector.broadcast %5 : vector<2x1xf32> to vector<2x800xf32>
    %7 = arith.subf %0, %6 : vector<2x800xf32>
    %cst_4 = arith.constant dense<0.000000e+00> : vector<2xf32>
    %8 = vector.multi_reduction <add>, %1, %cst_4 [1] : vector<2x800xf32> to vector<2xf32>
    %9 = vector.shape_cast %8 : vector<2xf32> to vector<2x1xf32>
    %cst_5 = arith.constant 8.000000e+02 : f32
    %10 = vector.broadcast %cst_5 : f32 to vector<2x1xf32>
    %11 = arith.divf %9, %10 : vector<2x1xf32>
    %12 = vector.broadcast %11 : vector<2x1xf32> to vector<2x800xf32>
    %13 = arith.subf %1, %12 : vector<2x800xf32>
    %14 = arith.mulf %13, %7 : vector<2x800xf32>
    %cst_6 = arith.constant dense<0.000000e+00> : vector<2xf32>
    %15 = vector.multi_reduction <add>, %14, %cst_6 [1] : vector<2x800xf32> to vector<2xf32>
    %16 = vector.shape_cast %15 : vector<2xf32> to vector<2x1xf32>
    %17 = arith.mulf %13, %13 : vector<2x800xf32>
    %cst_7 = arith.constant dense<0.000000e+00> : vector<2xf32>
    %18 = vector.multi_reduction <add>, %17, %cst_7 [1] : vector<2x800xf32> to vector<2xf32>
    %19 = vector.shape_cast %18 : vector<2xf32> to vector<2x1xf32>
    %cst_8 = arith.constant 1.000000e-30 : f32
    %20 = vector.broadcast %cst_8 : f32 to vector<2x1xf32>
    %21 = arith.maximumf %19, %20 : vector<2x1xf32>
    %22 = arith.divf %16, %21 : vector<2x1xf32>
    %23 = vector.broadcast %22 : vector<2x1xf32> to vector<2x800xf32>
    %24 = arith.mulf %23, %13 : vector<2x800xf32>
    %25 = arith.subf %7, %24 : vector<2x800xf32>
    %26 = arith.mulf %24, %24 : vector<2x800xf32>
    %cst_9 = arith.constant dense<0.000000e+00> : vector<2xf32>
    %27 = vector.multi_reduction <add>, %26, %cst_9 [1] : vector<2x800xf32> to vector<2xf32>
    %28 = vector.shape_cast %27 : vector<2xf32> to vector<2x1xf32>
    %29 = arith.mulf %25, %25 : vector<2x800xf32>
    %cst_10 = arith.constant dense<0.000000e+00> : vector<2xf32>
    %30 = vector.multi_reduction <add>, %29, %cst_10 [1] : vector<2x800xf32> to vector<2xf32>
    %31 = vector.shape_cast %30 : vector<2xf32> to vector<2x1xf32>
    %cst_11 = arith.constant 1.000000e-30 : f32
    %32 = vector.broadcast %cst_11 : f32 to vector<2x1xf32>
    %33 = arith.maximumf %28, %32 : vector<2x1xf32>
    %34 = math.log %33 : vector<2x1xf32>
    %cst_12 = arith.constant 1.000000e-30 : f32
    %35 = vector.broadcast %cst_12 : f32 to vector<2x1xf32>
    %36 = arith.maximumf %31, %35 : vector<2x1xf32>
    %37 = math.log %36 : vector<2x1xf32>
    %38 = arith.subf %34, %37 : vector<2x1xf32>
    %cst_13 = arith.constant -8.68588924 : f32
    %39 = vector.broadcast %cst_13 : f32 to vector<2x1xf32>
    %40 = arith.mulf %39, %38 : vector<2x1xf32>
    %c0_14 = arith.constant 0 : index
    %c0_15 = arith.constant 0 : index
    %41 = vector.load %arg3[%c0_14, %c0_15] : memref<2x1xf32, #tpu.memory_space<vmem>>, vector<2x1xf32>
    tpu.vector_store %arg3[%c0_14, %c0_15], %40 {strides = array<i32>} : memref<2x1xf32, #tpu.memory_space<vmem>>, vector<2x1xf32>,
    return
  }
  func.func @transform_0(%arg0: i32) -> (i32, i32) {
    %c0_i32 = arith.constant 0 : i32
    %c0_i32_0 = arith.constant 0 : i32
    return %arg0, %c0_i32 : i32, i32
  }
  func.func @transform_1(%arg0: i32) -> (i32, i32) {
    %c0_i32 = arith.constant 0 : i32
    %c0_i32_0 = arith.constant 0 : i32
    return %arg0, %c0_i32 : i32, i32
  }
  func.func @transform_2(%arg0: i32) -> (i32, i32) {
    %c0_i32 = arith.constant 0 : i32
    %c0_i32_0 = arith.constant 0 : i32
    return %arg0, %c0_i32 : i32, i32
  }
}

</mosaic_0001>

<llo_original>
// kernel: tpu_custom_call.1
$region0: #{tpu_custom_call.1}
  #allocation0 [shape = 'u32[]', space=smem, size = 0x4, offset = 0x4, fixed_abs, tag = 'smem constant byte address 0x4 - core index']
  #allocation1 [shape = 'u32[144,128]{1,0:T(1,128)}', space=vmem, size = 0x12000, scoped, tag = 'internal scratch']
  %s0 = inlined_call_operand.hbm [shape: f32[2,800], index: 0, kind: input, shape index: {}]
  %s1 = inlined_call_operand.hbm [shape: f32[2,800], index: 1, kind: input, shape index: {}]
  %s2 = inlined_call_operand.vmem [shape: f32[2,1], index: 2, kind: output, shape index: {}]
  %s3 = sld [smem:[#allocation0]]
  $region26: #{tpu_custom_call.1} parent=0
    _
  %s5 = ssub.s32 1, %s3
  %s6 = scalar_select 0, %s5, %s3
  $region1: #{tpu_custom_call.1} parent=0
    #allocation2 [shape = 'u8[7168]{0}', space=vmem, size = 0x1c00, scoped, tag = 'input window, operand 0, single buffered']
    #allocation3 [shape = 's32[1]{0}', space=sflag, size = 0x4, scoped, tag = 'scoped memory for tpu_custom_call.1']
    #allocation4 [shape = 'u8[7168]{0}', space=vmem, size = 0x1c00, scoped, tag = 'input window, operand 1, single buffered']
    #allocation5 [shape = 's32[1]{0}', space=sflag, size = 0x4, scoped, tag = 'scoped memory for tpu_custom_call.1']
    %7 = vsyncpa [#allocation3], 0
    %8 = vsyncpa [#allocation5], 0
    // Predicated region
    $region2: #{tpu_custom_call.1} parent=1 // pred_check
      _
    $region3: #{tpu_custom_call.1} parent=1 // pred_check_branch
      %10 = sbr.rel (0) target = $region5
    $region4: #{tpu_custom_call.1} parent=1 // pred_region
      %s12 = ssub.s32 224, 224
      %13 = vsyncadd [#allocation3], %s12
      %s15 = sshll.u32 [#allocation2], 4
      %s16 = int_to_ptr.vmem [resolvable:$true] %s15
      %18 = dma.hbm_to_vmem [thread:$0]  %s0, 224, %s16, [#allocation3]
    $region5: #{tpu_custom_call.1} parent=1 // pred_fallthru
      _
    // Predicated region
    $region6: #{tpu_custom_call.1} parent=1 // pred_check
      _
    $region7: #{tpu_custom_call.1} parent=1 // pred_check_branch
      %20 = sbr.rel (0) target = $region9
    $region8: #{tpu_custom_call.1} parent=1 // pred_region
      %s22 = ssub.s32 224, 224
      %23 = vsyncadd [#allocation5], %s22
      %s25 = sshll.u32 [#allocation4], 4
      %s26 = int_to_ptr.vmem [resolvable:$true] %s25
      %28 = dma.hbm_to_vmem [thread:$0]  %s1, 224, %s26, [#allocation5]
    $region9: #{tpu_custom_call.1} parent=1 // pred_fallthru
      _
    // Predicated region
    $region10: #{tpu_custom_call.1} parent=1 // pred_check
      _
    $region11: #{tpu_custom_call.1} parent=1 // pred_check_branch
      %30 = sbr.rel (0) target = $region13
    $region12: #{tpu_custom_call.1} parent=1 // pred_region
      %31 = dma.done [#allocation3], 224
    $region13: #{tpu_custom_call.1} parent=1 // pred_fallthru
      _
    // Predicated region
    $region14: #{tpu_custom_call.1} parent=1 // pred_check
      _
    $region15: #{tpu_custom_call.1} parent=1 // pred_check_branch
      %33 = sbr.rel (0) target = $region17
    $region16: #{tpu_custom_call.1} parent=1 // pred_region
      %34 = dma.done [#allocation5], 224
    $region17: #{tpu_custom_call.1} parent=1 // pred_fallthru
      _
    %v35 = vld [vmem:[#allocation2] sm:$0xff]
    %v36 = vld [vmem:[#allocation2 + $0x8] sm:$0x3f]
    %v37 = vld [vmem:[#allocation4] sm:$0xff]
    %v38 = vld [vmem:[#allocation4 + $0x8] sm:$0x3f]
    %v41 = vcombine.high %v35, %v35
    %v43 = vunpack.c.l.s4 1983009808
    %v44 = vunpack.c.0.s8 %v43
    %v45 = vlaneseq
    %v46 = vshrl.u32 %v45, 7
    %v47 = vsub.s32 %v44, %v46
    %v48 = vrot.slane %v35, %v47
    %v50 = vunpack.c.l.s4 1983009808
    %v51 = vunpack.c.0.s8 %v50
    %v52 = vlaneseq
    %v53 = vshrl.u32 %v52, 7
    %v54 = vsub.s32 %v51, %v53
    %v55 = vrot.slane %v41, %v54
    %v56 = vcombine.high %v48, %v48
    %v57 = vcombine.high %v55, %v55
    %v58 = vcombine.high %v36, %v36
    %v60 = vunpack.c.l.s4 1983009808
    %v61 = vunpack.c.0.s8 %v60
    %v62 = vlaneseq
    %v63 = vshrl.u32 %v62, 7
    %v64 = vsub.s32 %v61, %v63
    %v65 = vrot.slane %v36, %v64
    %v67 = vunpack.c.l.s4 1983009808
    %v68 = vunpack.c.0.s8 %v67
    %v69 = vlaneseq
    %v70 = vshrl.u32 %v69, 7
    %v71 = vsub.s32 %v68, %v70
    %v72 = vrot.slane %v58, %v71
    %v73 = vcombine.high %v65, %v65
    %vm81 = vcmask 1041408
    %v82 = vsel %vm81, %v48, 0.0
    %v83 = vsel %vm81, %v56, 0.0
    %v84 = vadd.f32 %v82, %v83
    %v85 = vsel %vm81, %v55, 0.0
    %v86 = vadd.f32 %v84, %v85
    %v87 = vsel %vm81, %v57, 0.0
    %v88 = vadd.f32 %v86, %v87
    %v89 = vsel %vm81, %v65, 0.0
    %v90 = vadd.f32 %v88, %v89
    %v91 = vsel %vm81, %v73, 0.0
    %v92 = vadd.f32 %v90, %v91
    %vm93 = vcmask 254976
    %v94 = vsel %vm93, %v72, 0.0
    %v95 = vadd.f32 %v92, %v94
    %96 = vadd.xlane.f32.xlu0 %v95
    %v97 = vpop.xlane.xlu0 %96
    %v98 = vrcp.pop 800.0
    %v99 = vmul.f32 %v97, %v98
    %v102 = vunpack.c.l.s4 269488144
    %v103 = vunpack.c.0.s8 %v102
    %v104 = vlaneseq
    %v105 = vshrl.u32 %v104, 7
    %v106 = vsub.s32 %v103, %v105
    %v107 = vrot.slane %v99, %v106
    %v109 = vsub.f32 %v35, %v107
    %v110 = vsub.f32 %v36, %v107
    %v113 = vcombine.high %v37, %v37
    %v115 = vunpack.c.l.s4 1983009808
    %v116 = vunpack.c.0.s8 %v115
    %v117 = vlaneseq
    %v118 = vshrl.u32 %v117, 7
    %v119 = vsub.s32 %v116, %v118
    %v120 = vrot.slane %v37, %v119
    %v122 = vunpack.c.l.s4 1983009808
    %v123 = vunpack.c.0.s8 %v122
    %v124 = vlaneseq
    %v125 = vshrl.u32 %v124, 7
    %v126 = vsub.s32 %v123, %v125
    %v127 = vrot.slane %v113, %v126
    %v128 = vcombine.high %v120, %v120
    %v129 = vcombine.high %v127, %v127
    %v130 = vcombine.high %v38, %v38
    %v132 = vunpack.c.l.s4 1983009808
    %v133 = vunpack.c.0.s8 %v132
    %v134 = vlaneseq
    %v135 = vshrl.u32 %v134, 7
    %v136 = vsub.s32 %v133, %v135
    %v137 = vrot.slane %v38, %v136
    %v139 = vunpack.c.l.s4 1983009808
    %v140 = vunpack.c.0.s8 %v139
    %v141 = vlaneseq
    %v142 = vshrl.u32 %v141, 7
    %v143 = vsub.s32 %v140, %v142
    %v144 = vrot.slane %v130, %v143
    %v145 = vcombine.high %v137, %v137
    %v153 = vsel %vm81, %v120, 0.0
    %v154 = vsel %vm81, %v128, 0.0
    %v155 = vadd.f32 %v153, %v154
    %v156 = vsel %vm81, %v127, 0.0
    %v157 = vadd.f32 %v155, %v156
    %v158 = vsel %vm81, %v129, 0.0
    %v159 = vadd.f32 %v157, %v158
    %v160 = vsel %vm81, %v137, 0.0
    %v161 = vadd.f32 %v159, %v160
    %v162 = vsel %vm81, %v145, 0.0
    %v163 = vadd.f32 %v161, %v162
    %v164 = vsel %vm93, %v144, 0.0
    %v165 = vadd.f32 %v163, %v164
    %166 = vadd.xlane.f32.xlu0 %v165
    %v167 = vpop.xlane.xlu0 %166
    %v168 = vmul.f32 %v167, %v98
    %v171 = vunpack.c.l.s4 269488144
    %v172 = vunpack.c.0.s8 %v171
    %v173 = vlaneseq
    %v174 = vshrl.u32 %v173, 7
    %v175 = vsub.s32 %v172, %v174
    %v176 = vrot.slane %v168, %v175
    %v178 = vsub.f32 %v37, %v176
    %v179 = vsub.f32 %v38, %v176
    %v180 = vmul.f32 %v178, %v109
    %v181 = vmul.f32 %v179, %v110
    %v184 = vcombine.high %v180, %v180
    %v186 = vunpack.c.l.s4 1983009808
    %v187 = vunpack.c.0.s8 %v186
    %v188 = vlaneseq
    %v189 = vshrl.u32 %v188, 7
    %v190 = vsub.s32 %v187, %v189
    %v191 = vrot.slane %v180, %v190
    %v193 = vunpack.c.l.s4 1983009808
    %v194 = vunpack.c.0.s8 %v193
    %v195 = vlaneseq
    %v196 = vshrl.u32 %v195, 7
    %v197 = vsub.s32 %v194, %v196
    %v198 = vrot.slane %v184, %v197
    %v199 = vcombine.high %v191, %v191
    %v200 = vcombine.high %v198, %v198
    %v201 = vcombine.high %v181, %v181
    %v203 = vunpack.c.l.s4 1983009808
    %v204 = vunpack.c.0.s8 %v203
    %v205 = vlaneseq
    %v206 = vshrl.u32 %v205, 7
    %v207 = vsub.s32 %v204, %v206
    %v208 = vrot.slane %v181, %v207
    %v210 = vunpack.c.l.s4 1983009808
    %v211 = vunpack.c.0.s8 %v210
    %v212 = vlaneseq
    %v213 = vshrl.u32 %v212, 7
    %v214 = vsub.s32 %v211, %v213
    %v215 = vrot.slane %v201, %v214
    %v216 = vcombine.high %v208, %v208
    %v224 = vsel %vm81, %v191, 0.0
    %v225 = vsel %vm81, %v199, 0.0
    %v226 = vadd.f32 %v224, %v225
    %v227 = vsel %vm81, %v198, 0.0
    %v228 = vadd.f32 %v226, %v227
    %v229 = vsel %vm81, %v200, 0.0
    %v230 = vadd.f32 %v228, %v229
    %v231 = vsel %vm81, %v208, 0.0
    %v232 = vadd.f32 %v230, %v231
    %v233 = vsel %vm81, %v216, 0.0
    %v234 = vadd.f32 %v232, %v233
    %v235 = vsel %vm93, %v215, 0.0
    %v236 = vadd.f32 %v234, %v235
    %237 = vadd.xlane.f32.xlu0 %v236
    %v238 = vpop.xlane.xlu0 %237
    %v239 = vmul.f32 %v178, %v178
    %v240 = vmul.f32 %v179, %v179
    %v243 = vcombine.high %v239, %v239
    %v245 = vunpack.c.l.s4 1983009808
    %v246 = vunpack.c.0.s8 %v245
    %v247 = vlaneseq
    %v248 = vshrl.u32 %v247, 7
    %v249 = vsub.s32 %v246, %v248
    %v250 = vrot.slane %v239, %v249
    %v252 = vunpack.c.l.s4 1983009808
    %v253 = vunpack.c.0.s8 %v252
    %v254 = vlaneseq
    %v255 = vshrl.u32 %v254, 7
    %v256 = vsub.s32 %v253, %v255
    %v257 = vrot.slane %v243, %v256
    %v258 = vcombine.high %v250, %v250
    %v259 = vcombine.high %v257, %v257
    %v260 = vcombine.high %v240, %v240
    %v262 = vunpack.c.l.s4 1983009808
    %v263 = vunpack.c.0.s8 %v262
    %v264 = vlaneseq
    %v265 = vshrl.u32 %v264, 7
    %v266 = vsub.s32 %v263, %v265
    %v267 = vrot.slane %v240, %v266
    %v269 = vunpack.c.l.s4 1983009808
    %v270 = vunpack.c.0.s8 %v269
    %v271 = vlaneseq
    %v272 = vshrl.u32 %v271, 7
    %v273 = vsub.s32 %v270, %v272
    %v274 = vrot.slane %v260, %v273
    %v275 = vcombine.high %v267, %v267
    %v283 = vsel %vm81, %v250, 0.0
    %v284 = vsel %vm81, %v258, 0.0
    %v285 = vadd.f32 %v283, %v284
    %v286 = vsel %vm81, %v257, 0.0
    %v287 = vadd.f32 %v285, %v286
    %v288 = vsel %vm81, %v259, 0.0
    %v289 = vadd.f32 %v287, %v288
    %v290 = vsel %vm81, %v267, 0.0
    %v291 = vadd.f32 %v289, %v290
    %v292 = vsel %vm81, %v275, 0.0
    %v293 = vadd.f32 %v291, %v292
    %v294 = vsel %vm93, %v274, 0.0
    %v295 = vadd.f32 %v293, %v294
    %296 = vadd.xlane.f32.xlu0 %v295
    %v297 = vpop.xlane.xlu0 %296
    %v298 = vmax.f32 %v297, 1e-30
    %v299 = vrcp.pop %v298
    %v300 = vmul.f32 %v238, %v299
    %v303 = vcombine.high %v178, %v178
    %v305 = vunpack.c.l.s4 1983009808
    %v306 = vunpack.c.0.s8 %v305
    %v307 = vlaneseq
    %v308 = vshrl.u32 %v307, 7
    %v309 = vsub.s32 %v306, %v308
    %v310 = vrot.slane %v178, %v309
    %v312 = vunpack.c.l.s4 1983009808
    %v313 = vunpack.c.0.s8 %v312
    %v314 = vlaneseq
    %v315 = vshrl.u32 %v314, 7
    %v316 = vsub.s32 %v313, %v315
    %v317 = vrot.slane %v303, %v316
    %v318 = vcombine.high %v310, %v310
    %v319 = vcombine.high %v317, %v317
    %v320 = vcombine.high %v179, %v179
    %v322 = vunpack.c.l.s4 1983009808
    %v323 = vunpack.c.0.s8 %v322
    %v324 = vlaneseq
    %v325 = vshrl.u32 %v324, 7
    %v326 = vsub.s32 %v323, %v325
    %v327 = vrot.slane %v179, %v326
    %v329 = vunpack.c.l.s4 1983009808
    %v330 = vunpack.c.0.s8 %v329
    %v331 = vlaneseq
    %v332 = vshrl.u32 %v331, 7
    %v333 = vsub.s32 %v330, %v332
    %v334 = vrot.slane %v320, %v333
    %v335 = vcombine.high %v327, %v327
    %v343 = vmul.f32 %v300, %v310
    %v344 = vmul.f32 %v300, %v318
    %v345 = vmul.f32 %v300, %v317
    %v346 = vmul.f32 %v300, %v319
    %v347 = vmul.f32 %v300, %v327
    %v348 = vmul.f32 %v300, %v335
    %v349 = vmul.f32 %v300, %v334
    %v357 = vcombine.low %v343, %v344
    %v358 = vcombine.low %v345, %v346
    %v360 = vunpack.c.l.s4 1983009808
    %v361 = vunpack.c.0.s8 %v360
    %v362 = vlaneseq
    %v363 = vshrl.u32 %v362, 7
    %v364 = vsub.s32 %v361, %v363
    %v365 = vrot.slane %v357, %v364
    %v367 = vunpack.c.l.s4 1983009808
    %v368 = vunpack.c.0.s8 %v367
    %v369 = vlaneseq
    %v370 = vshrl.u32 %v369, 7
    %v371 = vsub.s32 %v368, %v370
    %v372 = vrot.slane %v358, %v371
    %v373 = vcombine.low %v365, %v372
    %v374 = vcombine.low %v347, %v348
    %v376 = vunpack.c.l.s4 1983009808
    %v377 = vunpack.c.0.s8 %v376
    %v378 = vlaneseq
    %v379 = vshrl.u32 %v378, 7
    %v380 = vsub.s32 %v377, %v379
    %v381 = vrot.slane %v374, %v380
    %v383 = vunpack.c.l.s4 1983009808
    %v384 = vunpack.c.0.s8 %v383
    %v385 = vlaneseq
    %v386 = vshrl.u32 %v385, 7
    %v387 = vsub.s32 %v384, %v386
    %v388 = vrot.slane %v349, %v387
    %v389 = vcombine.low %v381, %v388
    %v392 = vsub.f32 %v109, %v373
    %v393 = vsub.f32 %v110, %v389
    %v394 = vmul.f32 %v343, %v343
    %v395 = vmul.f32 %v344, %v344
    %v396 = vmul.f32 %v345, %v345
    %v397 = vmul.f32 %v346, %v346
    %v398 = vmul.f32 %v347, %v347
    %v399 = vmul.f32 %v348, %v348
    %v400 = vmul.f32 %v349, %v349
    %v401 = vsel %vm81, %v394, 0.0
    %v402 = vsel %vm81, %v395, 0.0
    %v403 = vadd.f32 %v401, %v402
    %v404 = vsel %vm81, %v396, 0.0
    %v405 = vadd.f32 %v403, %v404
    %v406 = vsel %vm81, %v397, 0.0
    %v407 = vadd.f32 %v405, %v406
    %v408 = vsel %vm81, %v398, 0.0
    %v409 = vadd.f32 %v407, %v408
    %v410 = vsel %vm81, %v399, 0.0
    %v411 = vadd.f32 %v409, %v410
    %v412 = vsel %vm93, %v400, 0.0
    %v413 = vadd.f32 %v411, %v412
    %414 = vadd.xlane.f32.xlu0 %v413
    %v415 = vpop.xlane.xlu0 %414
    %v416 = vmul.f32 %v392, %v392
    %v417 = vmul.f32 %v393, %v393
    %v420 = vcombine.high %v416, %v416
    %v422 = vunpack.c.l.s4 1983009808
    %v423 = vunpack.c.0.s8 %v422
    %v424 = vlaneseq
    %v425 = vshrl.u32 %v424, 7
    %v426 = vsub.s32 %v423, %v425
    %v427 = vrot.slane %v416, %v426
    %v429 = vunpack.c.l.s4 1983009808
    %v430 = vunpack.c.0.s8 %v429
    %v431 = vlaneseq
    %v432 = vshrl.u32 %v431, 7
    %v433 = vsub.s32 %v430, %v432
    %v434 = vrot.slane %v420, %v433
    %v435 = vcombine.high %v427, %v427
    %v436 = vcombine.high %v434, %v434
    %v437 = vcombine.high %v417, %v417
    %v439 = vunpack.c.l.s4 1983009808
    %v440 = vunpack.c.0.s8 %v439
    %v441 = vlaneseq
    %v442 = vshrl.u32 %v441, 7
    %v443 = vsub.s32 %v440, %v442
    %v444 = vrot.slane %v417, %v443
    %v446 = vunpack.c.l.s4 1983009808
    %v447 = vunpack.c.0.s8 %v446
    %v448 = vlaneseq
    %v449 = vshrl.u32 %v448, 7
    %v450 = vsub.s32 %v447, %v449
    %v451 = vrot.slane %v437, %v450
    %v452 = vcombine.high %v444, %v444
    %v460 = vsel %vm81, %v427, 0.0
    %v461 = vsel %vm81, %v435, 0.0
    %v462 = vadd.f32 %v460, %v461
    %v463 = vsel %vm81, %v434, 0.0
    %v464 = vadd.f32 %v462, %v463
    %v465 = vsel %vm81, %v436, 0.0
    %v466 = vadd.f32 %v464, %v465
    %v467 = vsel %vm81, %v444, 0.0
    %v468 = vadd.f32 %v466, %v467
    %v469 = vsel %vm81, %v452, 0.0
    %v470 = vadd.f32 %v468, %v469
    %v471 = vsel %vm93, %v451, 0.0
    %v472 = vadd.f32 %v470, %v471
    %473 = vadd.xlane.f32.xlu0 %v472
    %v474 = vpop.xlane.xlu0 %473
    %v475 = vmax.f32 %v415, 1e-30
    %v476 = vlog2.pop %v475
    %v477 = vmul.f32 %v476, 0.6931472
    %v478 = vmax.f32 %v474, 1e-30
    %v479 = vlog2.pop %v478
    %v480 = vmul.f32 %v479, 0.6931472
    %v481 = vsub.f32 %v477, %v480
    %v482 = vmul.f32 %v481, -8.685889
    %vm483 = vcmask 1024
    %484 = vst.msk [vmem:[%s2] sm:$0x3] %vm483, %v482
    // Predicated region
    $region18: #{tpu_custom_call.1} parent=1 // pred_check
      _
    $region19: #{tpu_custom_call.1} parent=1 // pred_check_branch
      %486 = sbr.rel (0) target = $region21
    $region20: #{tpu_custom_call.1} parent=1 // pred_region
      _
    $region21: #{tpu_custom_call.1} parent=1 // pred_fallthru
      _
    // Predicated region
    $region22: #{tpu_custom_call.1} parent=1 // pred_check
      _
    $region23: #{tpu_custom_call.1} parent=1 // pred_check_branch
      %488 = sbr.rel (0) target = $region25
    $region24: #{tpu_custom_call.1} parent=1 // pred_region
      _
    $region25: #{tpu_custom_call.1} parent=1 // pred_fallthru
      _
    %489 = vsyncpa [#allocation3], 1
    %490 = vsyncpa [#allocation5], 1

</llo_original>
